<compile_context>
chip_gen: v6e
topology: v6e:2x2x1
jax: 0.10.0
libtpu: 0.0.40
codegen_flags: <defaults>
</compile_context>

<pallas_src>
import functools

import jax
import jax.numpy as jnp
from jax import lax
from jax.experimental import pallas as pl
from jax.experimental.pallas import tpu as pltpu

_LANES = 128


def _round_up(x, m):
    return ((x + m - 1) // m) * m


def _native_sublanes(dtype):
    # dtype-native sublane packing: 8 for f32, 16 for bf16, 32 for int8/fp8.
    itemsize = jnp.dtype(dtype).itemsize
    return max(8, 8 * (4 // max(1, itemsize)))


def _default_tile_bytes():
    # v7x-class (64 MiB VMEM, ~3.2 TB/s HBM) wants larger tiles to amortize per-step
    # overhead; v5e/v6e (128 MiB VMEM) see diminishing returns past ~4 MiB.
    try:
        vmem = pltpu.get_tpu_info().vmem_capacity_bytes
        if vmem <= 96 * 1024 * 1024:
            return 6 * 1024 * 1024
    except Exception:
        pass
    return 4 * 1024 * 1024


def _loss_elt(p, t, loss_type):
    diff = p.astype(jnp.float32) - t.astype(jnp.float32)
    if loss_type == "l1":
        return jnp.abs(diff)
    return diff * diff


# ----------------------------------------------------------------------------------------
# Aligned path: inputs viewed as (B, R, 128); blocks (Bt, rows_tile, 128); out (ns, B, 1, 128)
# ----------------------------------------------------------------------------------------
def _kernel_rows(p_ref, t_ref, o_ref, *, loss_type, rows_total, rows_tile,
                 nr_per_split, mask_rows):
    s = pl.program_id(0)     # reduction-split index (megacore)
    ir = pl.program_id(2)    # row-tile index within this split (reduction axis)

    @pl.when(ir == 0)
    def _():
        o_ref[...] = jnp.zeros_like(o_ref)

    elt = _loss_elt(p_ref[...], t_ref[...], loss_type)          # (Bt, Rt, 128)

    if mask_rows:
        # Mask rows of the (partially OOB or redundant clamped) final row tile.  Uses the
        # *unclamped* global row-tile index so duplicated clamped tiles contribute zero.
        r_tile = s * nr_per_split + ir
        row = lax.broadcasted_iota(jnp.int32, elt.shape, 1)
        elt = jnp.where(row + r_tile * rows_tile < rows_total, elt, 0.0)

    partial = jnp.sum(elt, axis=1)                               # (Bt, 128), lane-dense
    o_ref[...] += partial[None, :, None, :]


def _run_rows(p2, t2, loss_type, tile_bytes, itemsize, sub, vmem_limit):
    B, n_feat = p2.shape
    R = n_feat // _LANES
    p3 = p2.reshape(B, R, _LANES)            # free reshape: no HBM copy
    t3 = t2.reshape(B, R, _LANES)

    row_bytes = _LANES * itemsize
    sample_bytes = _round_up(R, sub) * row_bytes           # VMEM (sublane-padded) footprint
    budget_rows = max(sub, (tile_bytes // row_bytes) // sub * sub)

    if sample_bytes <= tile_bytes:
        # Small-per-sample regime: whole sample per block, pack several samples per block.
        rows_tile = R
        nr = 1
        bt_budget = max(1, min(B, tile_bytes // sample_bytes))
        Bt = 1
        for d in range(bt_budget, 0, -1):                  # largest divisor of B <= budget
            if B % d == 0:
                Bt = d
                break
        nb = B // Bt
    else:
        # Large-per-sample regime: one sample per block, balanced row tiles.
        Bt = 1
        nb = B
        nr = pl.cdiv(R, budget_rows)
        rows_tile = _round_up(pl.cdiv(R, nr), sub)         # balanced: <8 rows of waste
        nr = pl.cdiv(R, rows_tile)

    # 2-way split of the row reduction so both v7x TensorCores get work when nb == 1.
    n_split = 2 if (nb == 1 and nr >= 2) else 1
    nr_ps = pl.cdiv(nr, n_split)
    mask_rows = (R % rows_tile != 0) or (n_split * nr_ps != nr)

    if n_split == 1:
        in_idx = lambda s, ib, ir: (ib, ir, 0)
    else:
        # Clamp so the DMA never targets a fully out-of-bounds tile; the duplicated tile is
        # zeroed by the in-kernel mask (computed from the unclamped index).
        in_idx = lambda s, ib, ir: (ib, jnp.minimum(s * nr_ps + ir, nr - 1), 0)

    kernel = functools.partial(
        _kernel_rows, loss_type=loss_type, rows_total=R, rows_tile=rows_tile,
        nr_per_split=nr_ps, mask_rows=mask_rows)

    out = pl.pallas_call(
        kernel,
        out_shape=jax.ShapeDtypeStruct((n_split, B, 1, _LANES), jnp.float32),
        grid_spec=pltpu.PrefetchScalarGridSpec(
            num_scalar_prefetch=0,
            grid=(n_split, nb, nr_ps),
            in_specs=[
                pl.BlockSpec((Bt, rows_tile, _LANES), in_idx),
                pl.BlockSpec((Bt, rows_tile, _LANES), in_idx),
            ],
            out_specs=pl.BlockSpec((1, Bt, 1, _LANES),
                                   lambda s, ib, ir: (s, ib, 0, 0)),
        ),
        compiler_params=pltpu.CompilerParams(
            dimension_semantics=("parallel", "parallel", "arbitrary"),
            vmem_limit_bytes=vmem_limit,
        ),
        cost_estimate=pl.CostEstimate(
            flops=3 * B * n_feat, transcendentals=0,
            bytes_accessed=2 * B * n_feat * itemsize + n_split * B * _LANES * 4),
    )(p3, t3)

    return jnp.sum(out, axis=(0, 2, 3))                    # per-sample sums (B,)


# ----------------------------------------------------------------------------------------
# Ragged path (n_feat % 128 != 0): 2-D (B, tile_n) blocks with column masking; no padding.
# ----------------------------------------------------------------------------------------
def _kernel_flat(p_ref, t_ref, o_ref, *, loss_type, n_feat, tile_n,
                 nt_per_split, mask_cols):
    s = pl.program_id(0)
    it = pl.program_id(1)

    @pl.when(it == 0)
    def _():
        o_ref[...] = jnp.zeros_like(o_ref)

    elt = _loss_elt(p_ref[...], t_ref[...], loss_type)          # (B, tile_n)

    if mask_cols:
        c_tile = s * nt_per_split + it
        col = lax.broadcasted_iota(jnp.int32, elt.shape, 1)
        elt = jnp.where(col + c_tile * tile_n < n_feat, elt, 0.0)

    o_ref[...] += jnp.sum(elt, axis=-1, keepdims=True)[None]    # (1, B, 1)


def _run_flat(p2, t2, loss_type, tile_bytes, itemsize, sub, vmem_limit):
    B, n_feat = p2.shape
    pad_B = _round_up(B, sub)     # VMEM sublane padding of the batch dim (B is the sublane axis)
    # TODO(synk): for very large B (pad_B*128*itemsize > tile_bytes) this ragged path would
    # need batch tiling as well; not implemented (loss batches are small in practice).

    tile_n = max(_LANES, (tile_bytes // (pad_B * itemsize)) // _LANES * _LANES)
    nt = pl.cdiv(n_feat, tile_n)
    if nt == 1:
        tile_n = n_feat                                       # full-extent block: always legal
    else:
        tile_n = _round_up(pl.cdiv(n_feat, nt), _LANES)       # balanced tiles
        nt = pl.cdiv(n_feat, tile_n)

    n_split = 2 if nt >= 2 else 1
    nt_ps = pl.cdiv(nt, n_split)
    mask_cols = (n_feat % tile_n != 0) or (n_split * nt_ps != nt)

    if n_split == 1:
        in_idx = lambda s, it: (0, it)
    else:
        in_idx = lambda s, it: (0, jnp.minimum(s * nt_ps + it, nt - 1))

    kernel = functools.partial(
        _kernel_flat, loss_type=loss_type, n_feat=n_feat, tile_n=tile_n,
        nt_per_split=nt_ps, mask_cols=mask_cols)

    out = pl.pallas_call(
        kernel,
        out_shape=jax.ShapeDtypeStruct((n_split, B, 1), jnp.float32),
        grid_spec=pltpu.PrefetchScalarGridSpec(
            num_scalar_prefetch=0,
            grid=(n_split, nt_ps),
            in_specs=[
                pl.BlockSpec((B, tile_n), in_idx),
                pl.BlockSpec((B, tile_n), in_idx),
            ],
            out_specs=pl.BlockSpec((1, B, 1), lambda s, it: (s, 0, 0)),
        ),
        compiler_params=pltpu.CompilerParams(
            dimension_semantics=("parallel", "arbitrary"),
            vmem_limit_bytes=vmem_limit,
        ),
        cost_estimate=pl.CostEstimate(
            flops=3 * B * n_feat, transcendentals=0,
            bytes_accessed=2 * B * n_feat * itemsize + n_split * B * 4),
    )(p2, t2)

    return jnp.sum(out, axis=(0, 2))                        # per-sample sums (B,)


# ----------------------------------------------------------------------------------------
# Public wrapper (== MatchingLoss.forward)
# ----------------------------------------------------------------------------------------
def matching_loss(predict, target, weights=None, *, loss_type="l1",
                  is_weighted=False, tile_bytes=None):
    if loss_type not in ("l1", "l2"):
        raise ValueError(f"invalid loss type {loss_type}")
    assert predict.shape == target.shape
    B = predict.shape[0]
    n_feat = 1
    for d in predict.shape[1:]:
        n_feat *= d
    if tile_bytes is None:
        tile_bytes = _default_tile_bytes()

    itemsize = jnp.dtype(predict.dtype).itemsize
    sub = _native_sublanes(predict.dtype)
    vmem_limit = 40 * 1024 * 1024   # explicit limit is load-bearing on v5e (16 MiB default)

    p2 = predict.reshape(B, n_feat)   # free, contiguous reshape -- no jnp.pad / copies
    t2 = target.reshape(B, n_feat)

    if n_feat % _LANES == 0:
        per_sample = _run_rows(p2, t2, loss_type, tile_bytes, itemsize, sub, vmem_limit)
    else:
        per_sample = _run_flat(p2, t2, loss_type, tile_bytes, itemsize, sub, vmem_limit)

    if is_weighted and weights is not None:
        # TODO(synk): assumes per-sample weights ((B,) or (B,1)) broadcast over features,
        # matching `weights * loss` in the original module for per-sample weights.
        per_sample = per_sample * weights.reshape(B).astype(jnp.float32)
    return jnp.sum(per_sample) / jnp.float32(B * n_feat)


def _reference_matching_loss(predict, target, weights=None, *, loss_type="l1",
                             is_weighted=False):
    diff = predict.astype(jnp.float32) - target.astype(jnp.float32)
    loss = jnp.abs(diff) if loss_type == "l1" else diff * diff
    B = predict.shape[0]
    loss = loss.reshape(B, -1)                                  # 'b ... -> b (...)'
    if is_weighted and weights is not None:
        loss = weights.reshape(B, 1).astype(jnp.float32) * loss
    return jnp.mean(loss)


if __name__ == "__main__":
    key = jax.random.PRNGKey(0)
    k1, k2, k3 = jax.random.split(key, 3)

    B, C, H, W = 2, 4, 16, 16
    predict = jax.random.normal(k1, (B, C, H, W), dtype=jnp.float32)
    target = jax.random.normal(k2, (B, C, H, W), dtype=jnp.float32)
    weights = jax.random.uniform(k3, (B,), dtype=jnp.float32) + 0.5

    def _check(out, ref):
        out = jax.block_until_ready(out)
        assert jnp.allclose(out, ref, atol=1e-5, rtol=1e-5), (out, ref)

    # l1, weighted (aligned path)
    _check(matching_loss(predict, target, weights, loss_type="l1", is_weighted=True),
           _reference_matching_loss(predict, target, weights, loss_type="l1",
                                    is_weighted=True))

    # l2, unweighted (aligned path)
    _check(matching_loss(predict, target, None, loss_type="l2", is_weighted=False),
           _reference_matching_loss(predict, target, None, loss_type="l2",
                                    is_weighted=False))

    # ragged feature count (300, not a multiple of 128) -> masked 2-D path, no padding copies
    predict_odd = jax.random.normal(k1, (B, 3, 10, 10), dtype=jnp.float32)
    target_odd = jax.random.normal(k2, (B, 3, 10, 10), dtype=jnp.float32)
    _check(matching_loss(predict_odd, target_odd, weights, loss_type="l1",
                         is_weighted=True),
           _reference_matching_loss(predict_odd, target_odd, weights, loss_type="l1",
                                    is_weighted=True))

    # tiny tile budget forces the tiled + masked + 2-way reduction-split path (aligned)
    p_big = jax.random.normal(k1, (1, 5, 64, 64), dtype=jnp.float32)   # 160 rows of 128
    t_big = jax.random.normal(k2, (1, 5, 64, 64), dtype=jnp.float32)
    w1 = jnp.full((1,), 1.3, dtype=jnp.float32)
    _check(matching_loss(p_big, t_big, w1, loss_type="l2", is_weighted=True,
                         tile_bytes=32 * 1024),
           _reference_matching_loss(p_big, t_big, w1, loss_type="l2", is_weighted=True))

    # tiny tile budget + ragged -> tiled masked 2-D path with the reduction split
    _check(matching_loss(predict_odd, target_odd, weights, loss_type="l2",
                         is_weighted=True, tile_bytes=4096),
           _reference_matching_loss(predict_odd, target_odd, weights, loss_type="l2",
                                    is_weighted=True))

    print("KERNEL_OK")
</pallas_src>

<mosaic_0001>
module attributes {stable_mosaic.version = 11 : i64} {
  func.func @_kernel_rows(%arg0: i32, %arg1: i32, %arg2: i32, %arg3: memref<2x8x128xf32, #tpu.memory_space<vmem>>, %arg4: memref<2x8x128xf32, #tpu.memory_space<vmem>>, %arg5: memref<1x2x1x128xf32, #tpu.memory_space<vmem>>) attributes {dimension_semantics = [#tpu.dimension_semantics<parallel>, #tpu.dimension_semantics<parallel>, #tpu.dimension_semantics<arbitrary>], iteration_bounds = array<i64: 1, 1, 1>, scalar_prefetch = 0 : i64, scratch_operands = 0 : i64, tpu.core_type = #tpu.core_type<tc>, window_params = [{transform_indices = @transform_0, window_bounds = array<i64: 2, 8, 128>}, {transform_indices = @transform_1, window_bounds = array<i64: 2, 8, 128>}, {transform_indices = @transform_2, window_bounds = array<i64: 1, 2, 1, 128>}]} {
    %c0_i32 = arith.constant 0 : i32
    %0 = arith.cmpi eq, %arg2, %c0_i32 : i32
    %1 = arith.extui %0 : i1 to i32
    %c0_i32_0 = arith.constant 0 : i32
    %2 = arith.cmpi ne, %1, %c0_i32_0 : i32
    scf.if %2 {
      %cst_14 = arith.constant 0.000000e+00 : f32
      %12 = vector.broadcast %cst_14 : f32 to vector<1x2x1x128xf32>
      %c0_15 = arith.constant 0 : index
      %c0_16 = arith.constant 0 : index
      %c0_17 = arith.constant 0 : index
      %c0_18 = arith.constant 0 : index
      %13 = vector.load %arg5[%c0_15, %c0_16, %c0_17, %c0_18] : memref<1x2x1x128xf32, #tpu.memory_space<vmem>>, vector<1x2x1x128xf32>
      tpu.vector_store %arg5[%c0_15, %c0_16, %c0_17, %c0_18], %12 {strides = array<i32>} : memref<1x2x1x128xf32, #tpu.memory_space<vmem>>, vector<1x2x1x128xf32>,
    } else {
    }
    %c0 = arith.constant 0 : index
    %c0_1 = arith.constant 0 : index
    %c0_2 = arith.constant 0 : index
    %3 = vector.load %arg3[%c0, %c0_1, %c0_2] : memref<2x8x128xf32, #tpu.memory_space<vmem>>, vector<2x8x128xf32>
    %c0_3 = arith.constant 0 : index
    %c0_4 = arith.constant 0 : index
    %c0_5 = arith.constant 0 : index
    %4 = vector.load %arg4[%c0_3, %c0_4, %c0_5] : memref<2x8x128xf32, #tpu.memory_space<vmem>>, vector<2x8x128xf32>
    %5 = arith.subf %3, %4 : vector<2x8x128xf32>
    %6 = math.absf %5 : vector<2x8x128xf32>
    %cst = arith.constant dense<0.000000e+00> : vector<2x128xf32>
    %7 = vector.multi_reduction <add>, %6, %cst [1] : vector<2x8x128xf32> to vector<2x128xf32>
    %c0_6 = arith.constant 0 : index
    %c0_7 = arith.constant 0 : index
    %c0_8 = arith.constant 0 : index
    %c0_9 = arith.constant 0 : index
    %8 = vector.load %arg5[%c0_6, %c0_7, %c0_8, %c0_9] : memref<1x2x1x128xf32, #tpu.memory_space<vmem>>, vector<1x2x1x128xf32>
    %9 = vector.shape_cast %7 : vector<2x128xf32> to vector<1x2x1x128xf32>
    %10 = arith.addf %8, %9 : vector<1x2x1x128xf32>
    %c0_10 = arith.constant 0 : index
    %c0_11 = arith.constant 0 : index
    %c0_12 = arith.constant 0 : index
    %c0_13 = arith.constant 0 : index
    %11 = vector.load %arg5[%c0_10, %c0_11, %c0_12, %c0_13] : memref<1x2x1x128xf32, #tpu.memory_space<vmem>>, vector<1x2x1x128xf32>
    tpu.vector_store %arg5[%c0_10, %c0_11, %c0_12, %c0_13], %10 {strides = array<i32>} : memref<1x2x1x128xf32, #tpu.memory_space<vmem>>, vector<1x2x1x128xf32>,
    return
  }
  func.func @transform_0(%arg0: i32, %arg1: i32, %arg2: i32) -> (i32, i32, i32) {
    %c0_i32 = arith.constant 0 : i32
    %c0_i32_0 = arith.constant 0 : i32
    return %arg1, %arg2, %c0_i32 : i32, i32, i32
  }
  func.func @transform_1(%arg0: i32, %arg1: i32, %arg2: i32) -> (i32, i32, i32) {
    %c0_i32 = arith.constant 0 : i32
    %c0_i32_0 = arith.constant 0 : i32
    return %arg1, %arg2, %c0_i32 : i32, i32, i32
  }
  func.func @transform_2(%arg0: i32, %arg1: i32, %arg2: i32) -> (i32, i32, i32, i32) {
    %c0_i32 = arith.constant 0 : i32
    %c0_i32_0 = arith.constant 0 : i32
    %c0_i32_1 = arith.constant 0 : i32
    return %arg0, %arg1, %c0_i32, %c0_i32_0 : i32, i32, i32, i32
  }
}

</mosaic_0001>

<llo_original>
// kernel: tpu_custom_call.1
$region0: #{tpu_custom_call.1}
  #allocation0 [shape = 'u32[]', space=smem, size = 0x4, offset = 0x4, fixed_abs, tag = 'smem constant byte address 0x4 - core index']
  #allocation1 [shape = 'u32[144,128]{1,0:T(1,128)}', space=vmem, size = 0x12000, scoped, tag = 'internal scratch']
  %s0 = inlined_call_operand.hbm [shape: f32[2,8,128], index: 0, kind: input, shape index: {}]
  %s1 = inlined_call_operand.hbm [shape: f32[2,8,128], index: 1, kind: input, shape index: {}]
  %s2 = inlined_call_operand.hbm [shape: f32[1,2,1,128], index: 2, kind: output, shape index: {}]
  %s3 = sld [smem:[#allocation0]]
  $region30: #{tpu_custom_call.1} parent=0
    _
  %s5 = ssub.s32 1, %s3
  %s6 = scalar_select 0, %s5, %s3
  $region1: #{tpu_custom_call.1} parent=0
    #allocation2 [shape = 'u8[8192]{0}', space=vmem, size = 0x2000, scoped, tag = 'input window, operand 0, single buffered']
    #allocation3 [shape = 's32[1]{0}', space=sflag, size = 0x4, scoped, tag = 'scoped memory for tpu_custom_call.1']
    #allocation4 [shape = 's32[1]{0}', space=sflag, size = 0x4, scoped, tag = 'scoped memory for tpu_custom_call.1']
    #allocation5 [shape = 'u8[8192]{0}', space=vmem, size = 0x2000, scoped, tag = 'input window, operand 1, single buffered']
    #allocation6 [shape = 's32[1]{0}', space=sflag, size = 0x4, scoped, tag = 'scoped memory for tpu_custom_call.1']
    #allocation7 [shape = 'u8[1024]{0}', space=vmem, size = 0x400, scoped, tag = 'output window, operand 0, single buffered']
    %7 = vsyncpa [#allocation3], 0
    %8 = vsyncpa [#allocation6], 0
    %9 = vsyncpa [#allocation4], 0
    // Predicated region
    $region2: #{tpu_custom_call.1} parent=1 // pred_check
      _
    $region3: #{tpu_custom_call.1} parent=1 // pred_check_branch
      %11 = sbr.rel (0) target = $region5
    $region4: #{tpu_custom_call.1} parent=1 // pred_region
      %s13 = ssub.s32 256, 256
      %14 = vsyncadd [#allocation3], %s13
      %s15 = sshll.u32 [#allocation2], 4
      %s16 = int_to_ptr.vmem [resolvable:$true] %s15
      %21 = dma.hbm_to_vmem [thread:$0]  %s0, 256, %s16, [#allocation3], 128, 128, 8
    $region5: #{tpu_custom_call.1} parent=1 // pred_fallthru
      _
    // Predicated region
    $region6: #{tpu_custom_call.1} parent=1 // pred_check
      _
    $region7: #{tpu_custom_call.1} parent=1 // pred_check_branch
      %23 = sbr.rel (0) target = $region9
    $region8: #{tpu_custom_call.1} parent=1 // pred_region
      %s25 = ssub.s32 256, 256
      %26 = vsyncadd [#allocation6], %s25
      %s27 = sshll.u32 [#allocation5], 4
      %s28 = int_to_ptr.vmem [resolvable:$true] %s27
      %33 = dma.hbm_to_vmem [thread:$0]  %s1, 256, %s28, [#allocation6], 128, 128, 8
    $region9: #{tpu_custom_call.1} parent=1 // pred_fallthru
      _
    // Predicated region
    $region10: #{tpu_custom_call.1} parent=1 // pred_check
      _
    $region11: #{tpu_custom_call.1} parent=1 // pred_check_branch
      %35 = sbr.rel (0) target = $region13
    $region12: #{tpu_custom_call.1} parent=1 // pred_region
      %36 = dma.done [#allocation3], 256
    $region13: #{tpu_custom_call.1} parent=1 // pred_fallthru
      _
    // Predicated region
    $region14: #{tpu_custom_call.1} parent=1 // pred_check
      _
    $region15: #{tpu_custom_call.1} parent=1 // pred_check_branch
      %38 = sbr.rel (0) target = $region17
    $region16: #{tpu_custom_call.1} parent=1 // pred_region
      %39 = dma.done [#allocation6], 256
    $region17: #{tpu_custom_call.1} parent=1 // pred_fallthru
      _
    %p40 = scmp.eq.s32.totalorder 0, 0
    // Predicated region
    $region18: #{tpu_custom_call.1} parent=1 // pred_check
      %p41 = pneg %p40
    $region19: #{tpu_custom_call.1} parent=1 // pred_check_branch
      %43 = sbr.rel (%p41) target = $region21
    $region20: #{tpu_custom_call.1} parent=1 // pred_region
      %44 = vst [vmem:[#allocation7] sm:$0x1] 0.0
      %45 = vst [vmem:[#allocation7 + $0x1] sm:$0x1] 0.0
    $region21: #{tpu_custom_call.1} parent=1 // pred_fallthru
      _
    %v46 = vld [vmem:[#allocation2] sm:$0xff]
    %v47 = vld [vmem:[#allocation2 + $0x8] sm:$0xff]
    %v48 = vld [vmem:[#allocation5] sm:$0xff]
    %v49 = vld [vmem:[#allocation5 + $0x8] sm:$0xff]
    %v50 = vsub.f32 %v46, %v48
    %v51 = vsub.f32 %v47, %v49
    %v52 = vand.u32 2147483647, %v50
    %v53 = vand.u32 2147483647, %v51
    %v54 = vrot.slane %v52, 4
    %v55 = vadd.f32 %v52, %v54
    %v56 = vrot.slane %v55, 2
    %v57 = vadd.f32 %v55, %v56
    %v58 = vrot.slane %v57, 1
    %v59 = vadd.f32 %v57, %v58
    %v60 = vrot.slane %v53, 4
    %v61 = vadd.f32 %v53, %v60
    %v62 = vrot.slane %v61, 2
    %v63 = vadd.f32 %v61, %v62
    %v64 = vrot.slane %v63, 1
    %v65 = vadd.f32 %v63, %v64
    %v66 = vld [vmem:[#allocation7] sm:$0x1]
    %v67 = vld [vmem:[#allocation7 + $0x1] sm:$0x1]
    %v68 = vadd.f32 %v66, %v59
    %v69 = vadd.f32 %v67, %v65
    %70 = vst [vmem:[#allocation7] sm:$0x1] %v68
    %71 = vst [vmem:[#allocation7 + $0x1] sm:$0x1] %v69
    // Predicated region
    $region22: #{tpu_custom_call.1} parent=1 // pred_check
      _
    $region23: #{tpu_custom_call.1} parent=1 // pred_check_branch
      %73 = sbr.rel (0) target = $region25
    $region24: #{tpu_custom_call.1} parent=1 // pred_region
      %s75 = ssub.s32 32, 32
      %76 = vsyncadd [#allocation4], %s75
      %s77 = sshll.u32 [#allocation7], 4
      %s78 = int_to_ptr.vmem [resolvable:$true] %s77
      %83 = dma.vmem_to_hbm [thread:$0]  %s78, 32, %s2, [#allocation4], 16, 16, 1
    $region25: #{tpu_custom_call.1} parent=1 // pred_fallthru
      _
    // Predicated region
    $region26: #{tpu_custom_call.1} parent=1 // pred_check
      _
    $region27: #{tpu_custom_call.1} parent=1 // pred_check_branch
      %85 = sbr.rel (0) target = $region29
    $region28: #{tpu_custom_call.1} parent=1 // pred_region
      %86 = dma.done [#allocation4], 32
    $region29: #{tpu_custom_call.1} parent=1 // pred_fallthru
      _
    %87 = vsyncpa [#allocation3], 1
    %88 = vsyncpa [#allocation6], 1
    %89 = vsyncpa [#allocation4], 1

</llo_original>
